<compile_context>
chip_gen: v7x
topology: tpu7x:2x2x1
jax: 0.10.0
libtpu: 0.0.40
codegen_flags: <defaults>
</compile_context>

<pallas_src>
import math
import numpy as np
import jax
import jax.numpy as jnp
from jax.experimental import pallas as pl
from jax.experimental.pallas import tpu as pltpu


def pos_enc(batch_size, nfrms, chns, coef=0.1, const=8):
    """Exact replica of PosEnc.forward (including its stateful `weight` loop)."""
    # TODO(synk): the stateful `weight *= t/...` loop is numerically degenerate
    # (weight collapses to 0 after t=0 of the first i); kept as-is to match the
    # PyTorch module exactly.
    pos = np.zeros((nfrms, chns), dtype=np.float32)
    weight = 1.0
    for i in range(int(chns / 2) - 1):
        for t in range(nfrms):
            weight = weight * t / pow(10, const * i / chns)
            pos[t, 2 * i] = coef * math.sin(weight)
            pos[t, 2 * i + 1] = coef * math.cos(weight)
    return jnp.asarray(np.broadcast_to(pos[None], (batch_size, nfrms, chns)).copy())


def attpool_kernel(att_ref, x_ref, o_ref):
    # att_ref: (1, C*T, 1)   f32, softmax weights with the last-frame residual folded in
    # x_ref  : (1, C*T, HWt) native dtype (f32 or bf16), fully sublane-dense
    # o_ref  : (1, C, HWt)   native dtype
    CT, HWt = x_ref.shape[1], x_ref.shape[2]
    C = o_ref.shape[1]
    T = CT // C
    # One full-width vmul per x vreg (cast to f32 right at the multiply), then a
    # sublane reduction over the T-aligned groups of the f32 product.  The
    # (C*T, HWt) -> (C, T, HWt) reshape is a free view (T=8 matches the f32
    # sublane tile).
    prod = att_ref[0] * x_ref[0].astype(jnp.float32)                  # (C*T, HWt) f32
    o_ref[0] = jnp.sum(prod.reshape(C, T, HWt), axis=1).astype(o_ref.dtype)


def _choose_hw_tile(C, T, HW, itemsize, out_itemsize, batch, budget_bytes=24 << 20):
    """Largest lane-dense HW tile whose per-step working set fits the budget."""
    if HW % 128 != 0:
        return HW, 1                              # can't tile cleanly; take the whole axis
    CT = C * T
    # Per-lane bytes: double-buffered x block + double-buffered out block +
    # one f32 (C*T, hw_tile) product intermediate.  C*T is sublane-dense for
    # every dtype, so this estimate is exact (no hidden sublane padding).
    per_lane = CT * itemsize * 2 + C * out_itemsize * 2 + CT * 4
    tile = min(HW, max(128, (budget_bytes // per_lane) // 128 * 128))
    while HW % tile != 0:                         # exact divisor -> no padded edge tiles
        tile -= 128
    tile = max(tile, 128)
    # Guarantee >= 2 total grid steps when possible so both TensorCores of a
    # dual-core part (v7x) get work; per-step overhead is negligible elsewhere.
    if batch * (HW // tile) < 2 and HW >= 256:
        half = (HW // 2) // 128 * 128
        while half >= 128 and HW % half != 0:
            half -= 128
        if half >= 128:
            tile = half
    return tile, HW // tile


def attpool(x, x_tre, w, b):
    """x: (B, C, T, H, W), x_tre: (B, T, Cin); w: (C, Cin), b: (C,)."""
    B, C, T, H, W = x.shape
    _, Tt, Cin = x_tre.shape
    assert Tt == T
    # PyTorch repeat_interleaves att_sc by x.shape[4] along BOTH spatial dims,
    # so it implicitly requires H == W.
    assert H == W
    HW = H * W
    CT = C * T

    # --- tiny glue in plain JAX (not the hot path): pos-enc + Linear + softmax ---
    x_pos = pos_enc(B, T, Cin)
    xt = (x_tre + x_pos).astype(jnp.float32)
    logits = jnp.einsum("btc,oc->bto", xt, w.astype(jnp.float32)) + b.astype(jnp.float32)
    att = jax.nn.softmax(logits, axis=1)                        # softmax over T (dim=1)
    att = jnp.transpose(att, (0, 2, 1))                         # (B, C, T)
    # Fold the `+ x[:, :, -1]` residual into the last frame's weight so the
    # kernel is one homogeneous weighted sum.
    att = att.at[:, :, -1].add(1.0)
    att = att.reshape(B, CT, 1).astype(jnp.float32)             # (B, C*T, 1)

    # Keep x in its native dtype in HBM; merge (C, T) and (H, W) — a free
    # reshape that makes the sublane dim fully dense for any dtype.
    x_flat = x.reshape(B, CT, HW)

    hw_tile, n_hw = _choose_hw_tile(C, T, HW, x_flat.dtype.itemsize,
                                    x_flat.dtype.itemsize, B)

    itemsize = x_flat.dtype.itemsize
    cost = pl.CostEstimate(
        flops=2 * B * C * T * HW,
        transcendentals=0,
        bytes_accessed=B * CT * HW * itemsize           # x
        + B * CT * 4                                    # att
        + B * C * HW * itemsize,                        # out
    )

    out = pl.pallas_call(
        attpool_kernel,
        out_shape=jax.ShapeDtypeStruct((B, C, HW), x.dtype),
        grid_spec=pltpu.PrefetchScalarGridSpec(
            num_scalar_prefetch=0,
            grid=(B, n_hw),
            in_specs=[
                pl.BlockSpec((1, CT, 1), lambda bi, hi: (bi, 0, 0)),
                pl.BlockSpec((1, CT, hw_tile), lambda bi, hi: (bi, 0, hi)),
            ],
            out_specs=pl.BlockSpec((1, C, hw_tile), lambda bi, hi: (bi, 0, hi)),
        ),
        compiler_params=pltpu.CompilerParams(
            dimension_semantics=("parallel", "parallel"),
            vmem_limit_bytes=48 << 20),
        cost_estimate=cost,
    )(att, x_flat)
    return out.reshape(B, C, H, W)


def attpool_ref(x, x_tre, w, b):
    """Pure-JAX reference mirroring the PyTorch forward (f32 math)."""
    B, C, T, H, W = x.shape
    x_pos = pos_enc(B, x_tre.shape[1], x_tre.shape[2])
    xt = (x_tre + x_pos).astype(jnp.float32)
    logits = jnp.einsum("btc,oc->bto", xt, w.astype(jnp.float32)) + b.astype(jnp.float32)
    att = jax.nn.softmax(logits, axis=1)                        # Softmax(dim=1)
    att_sc = jnp.transpose(att, (0, 2, 1))[:, :, :, None, None]  # B,C,T,1,1
    xf = x.astype(jnp.float32)
    return jnp.sum(att_sc * xf, axis=2) + xf[:, :, -1, :, :]


if __name__ == "__main__":
    B, C, T, H, W = 2, 4, 8, 16, 16   # x: B x C x T x H x W
    Cin = 8                           # x_tre: B x T x Cin  (in_ch=8, out_ch=C)

    key = jax.random.PRNGKey(0)
    k1, k2, k3, k4 = jax.random.split(key, 4)
    x = jax.random.normal(k1, (B, C, T, H, W), dtype=jnp.float32)
    x_tre = jax.random.normal(k2, (B, T, Cin), dtype=jnp.float32)
    bound = 1.0 / math.sqrt(Cin)
    w = jax.random.uniform(k3, (C, Cin), minval=-bound, maxval=bound, dtype=jnp.float32)
    b = jax.random.uniform(k4, (C,), minval=-bound, maxval=bound, dtype=jnp.float32)

    # f32 path
    out = jax.block_until_ready(attpool(x, x_tre, w, b))
    ref = jax.block_until_ready(attpool_ref(x, x_tre, w, b))
    assert out.shape == (B, C, H, W)
    np.testing.assert_allclose(np.asarray(out), np.asarray(ref), rtol=1e-5, atol=1e-5)

    # bf16 x path (halved DMA bytes); f32 accumulation inside the kernel.
    x_bf16 = x.astype(jnp.bfloat16)
    out_bf16 = jax.block_until_ready(attpool(x_bf16, x_tre, w, b))
    ref_bf16 = jax.block_until_ready(attpool_ref(x_bf16, x_tre, w, b))
    np.testing.assert_allclose(np.asarray(out_bf16, dtype=np.float32),
                               np.asarray(ref_bf16), rtol=2e-2, atol=5e-2)

    print("KERNEL_OK")
</pallas_src>

<mosaic_0001>
module attributes {stable_mosaic.version = 11 : i64} {
  func.func @attpool_kernel(%arg0: i32, %arg1: i32, %arg2: memref<1x32x1xf32, #tpu.memory_space<vmem>>, %arg3: memref<1x32x256xf32, #tpu.memory_space<vmem>>, %arg4: memref<1x4x256xf32, #tpu.memory_space<vmem>>) attributes {dimension_semantics = [#tpu.dimension_semantics<parallel>, #tpu.dimension_semantics<parallel>], iteration_bounds = array<i64: 2, 1>, scalar_prefetch = 0 : i64, scratch_operands = 0 : i64, tpu.core_type = #tpu.core_type<tc>, window_params = [{transform_indices = @transform_0, window_bounds = array<i64: 1, 32, 1>}, {transform_indices = @transform_1, window_bounds = array<i64: 1, 32, 256>}, {transform_indices = @transform_2, window_bounds = array<i64: 1, 4, 256>}]} {
    %c0 = arith.constant 0 : index
    %c0_0 = arith.constant 0 : index
    %c0_1 = arith.constant 0 : index
    %0 = vector.load %arg2[%c0, %c0_0, %c0_1] : memref<1x32x1xf32, #tpu.memory_space<vmem>>, vector<1x32x1xf32>
    %1 = vector.shape_cast %0 : vector<1x32x1xf32> to vector<32x1xf32>
    %c0_2 = arith.constant 0 : index
    %c0_3 = arith.constant 0 : index
    %c0_4 = arith.constant 0 : index
    %2 = vector.load %arg3[%c0_2, %c0_3, %c0_4] : memref<1x32x256xf32, #tpu.memory_space<vmem>>, vector<1x32x256xf32>
    %3 = vector.shape_cast %2 : vector<1x32x256xf32> to vector<32x256xf32>
    %4 = vector.broadcast %1 : vector<32x1xf32> to vector<32x256xf32>
    %5 = arith.mulf %4, %3 : vector<32x256xf32>
    %6 = vector.shape_cast %5 : vector<32x256xf32> to vector<4x8x256xf32>
    %cst = arith.constant dense<0.000000e+00> : vector<4x256xf32>
    %7 = vector.multi_reduction <add>, %6, %cst [1] : vector<4x8x256xf32> to vector<4x256xf32>
    %c0_5 = arith.constant 0 : index
    %c0_6 = arith.constant 0 : index
    %c0_7 = arith.constant 0 : index
    %8 = vector.load %arg4[%c0_5, %c0_6, %c0_7] : memref<1x4x256xf32, #tpu.memory_space<vmem>>, vector<1x4x256xf32>
    %9 = vector.shape_cast %8 : vector<1x4x256xf32> to vector<4x256xf32>
    %10 = vector.shape_cast %7 : vector<4x256xf32> to vector<1x4x256xf32>
    tpu.vector_store %arg4[%c0_5, %c0_6, %c0_7], %10 {strides = array<i32>} : memref<1x4x256xf32, #tpu.memory_space<vmem>>, vector<1x4x256xf32>,
    return
  }
  func.func @transform_0(%arg0: i32, %arg1: i32) -> (i32, i32, i32) {
    %c0_i32 = arith.constant 0 : i32
    %c0_i32_0 = arith.constant 0 : i32
    %c0_i32_1 = arith.constant 0 : i32
    return %arg0, %c0_i32, %c0_i32_0 : i32, i32, i32
  }
  func.func @transform_1(%arg0: i32, %arg1: i32) -> (i32, i32, i32) {
    %c0_i32 = arith.constant 0 : i32
    %c0_i32_0 = arith.constant 0 : i32
    return %arg0, %c0_i32, %arg1 : i32, i32, i32
  }
  func.func @transform_2(%arg0: i32, %arg1: i32) -> (i32, i32, i32) {
    %c0_i32 = arith.constant 0 : i32
    %c0_i32_0 = arith.constant 0 : i32
    return %arg0, %c0_i32, %arg1 : i32, i32, i32
  }
}

</mosaic_0001>

<llo_original>
// kernel: tpu_custom_call.1
$region0: #{tpu_custom_call.1}
  #allocation0 [shape = 'u32[]', space=smem, size = 0x4, offset = 0x4, fixed_abs, tag = 'smem constant byte address 0x4 - core index']
  #allocation1 [shape = 'u32[144,128]{1,0:T(1,128)}', space=vmem, size = 0x12000, scoped, tag = 'internal scratch']
  %s0 = inlined_call_operand.vmem [shape: f32[2,32,1], index: 0, kind: input, shape index: {}]
  %s1 = inlined_call_operand.hbm [shape: f32[2,32,256], index: 1, kind: input, shape index: {}]
  %s2 = inlined_call_operand.hbm [shape: f32[2,4,256], index: 2, kind: output, shape index: {}]
  %s3 = sld [smem:[#allocation0]]
  $region45: #{tpu_custom_call.1} parent=0
    _
  %s5 = ssub.s32 1, %s3
  %s6 = scalar_select 0, %s5, %s3
  $region1: #{tpu_custom_call.1} parent=0
    #allocation2 [shape = 'u8[65536]{0}', space=vmem, size = 0x10000, scoped, tag = 'input window, operand 1']
    #allocation3 [shape = 's32[2]{0}', space=sflag, size = 0x8, scoped, tag = 'scoped memory for tpu_custom_call.1']
    #allocation4 [shape = 's32[2]{0}', space=sflag, size = 0x8, scoped, tag = 'scoped memory for tpu_custom_call.1']
    #allocation5 [shape = 'u8[8192]{0}', space=vmem, size = 0x2000, scoped, tag = 'output window, operand 0']
    %7 = vsyncpa [#allocation3], 0
    %s8 = scalar_lea.sflag [#allocation3], 1
    %9 = vsyncpa %s8, 0
    %10 = vsyncpa [#allocation4], 0
    %s11 = scalar_lea.sflag [#allocation4], 1
    %12 = vsyncpa %s11, 0
    loop: start=0, step=1, limit=4
    $region2: #{tpu_custom_call.1} parent=1 // loop_pre_header
      _
    $region3: #{tpu_custom_call.1} parent=1 // loop_header
      %s14 = sphi 0, %s18
      %p15 = scmp.ge.s32.totalorder %s14, 4
      %s21 = sphi 0, %s33
      %s22 = sphi 0, %s29
      %s23 = sphi 0, %s21
      %s24 = sphi 0, %s22
      %s25 = sphi 0, %s23
      %s26 = sphi 0, %s24
      %s36 = sphi 0, %s38
      %s39 = sphi 0, %s36
      %s40 = sphi 0, %s39
      %s56 = sphi 0, %s40
      %s64 = sphi 0, %s66
      %s67 = sphi 0, %s64
      %s68 = sphi 0, %s67
      %s84 = sphi 0, %s68
      %s92 = sphi 0, %s94
      %s95 = sphi 0, %s92
      %s96 = sphi 0, %s95
      %s112 = sphi 0, %s96
    $region4: #{tpu_custom_call.1} parent=1 // loop_header_branch
      %17 = sbr.rel (%p15) target = $region8
    $region5: #{tpu_custom_call.1} parent=1 // loop_body
      %s19 = ssub.s32 %s14, 1
      %s20 = ssub.s32 %s14, 2
      %s27 = sadd.s32 1, %s22
      %p28 = scmp.ge.s32.totalorder %s27, 1
      %s29 = scalar_select %p28, 0, %s27
      %s30 = sadd.s32 1, %s21
      %s31 = scalar_select %p28, %s30, %s21
      %p32 = scmp.ge.s32.totalorder %s31, 2
      %s33 = scalar_select %p32, 0, %s31
      %s34 = ssub.s32 %s21, %s33
      %p35 = scmp.eq.s32.totalorder %s34, 0
      %s37 = sadd.s32 %s36, 1
      %s38 = scalar_select %p35, %s36, %s37
      %p41 = pneg %p35
      %p42 = scmp.eq.s32.totalorder %s14, 1
      %p43 = por %p41, %p42
      %p44 = scmp.ne.s32.totalorder %s36, %s39
      %p45 = scmp.eq.s32.totalorder %s14, 0
      %p46 = por %p44, %p45
      %p47 = scmp.ne.s32.totalorder %s36, %s39
      %p48 = scmp.eq.s32.totalorder %s19, 1
      %p49 = por %p47, %p48
      %p50 = scmp.ne.s32.totalorder %s39, %s40
      %p51 = scmp.eq.s32.totalorder %s19, 0
      %p52 = por %p50, %p51
      %p53 = scmp.ne.s32.totalorder %s39, %s40
      %p54 = scmp.eq.s32.totalorder %s20, 1
      %p55 = por %p53, %p54
      %p57 = scmp.ne.s32.totalorder %s40, %s56
      %p58 = scmp.eq.s32.totalorder %s20, 0
      %p59 = por %p57, %p58
      %s60 = ssub.s32 %s21, %s33
      %s61 = ssub.s32 %s22, %s29
      %s62 = sor.u32 %s60, %s61
      %p63 = scmp.eq.s32.totalorder %s62, 0
      %s65 = sadd.s32 %s64, 1
      %s66 = scalar_select %p63, %s64, %s65
      %p69 = pneg %p63
      %p70 = scmp.eq.s32.totalorder %s14, 1
      %p71 = por %p69, %p70
      %p72 = scmp.ne.s32.totalorder %s64, %s67
      %p73 = scmp.eq.s32.totalorder %s14, 0
      %p74 = por %p72, %p73
      %p75 = scmp.ne.s32.totalorder %s64, %s67
      %p76 = scmp.eq.s32.totalorder %s19, 1
      %p77 = por %p75, %p76
      %p78 = scmp.ne.s32.totalorder %s67, %s68
      %p79 = scmp.eq.s32.totalorder %s19, 0
      %p80 = por %p78, %p79
      %p81 = scmp.ne.s32.totalorder %s67, %s68
      %p82 = scmp.eq.s32.totalorder %s20, 1
      %p83 = por %p81, %p82
      %p85 = scmp.ne.s32.totalorder %s68, %s84
      %p86 = scmp.eq.s32.totalorder %s20, 0
      %p87 = por %p85, %p86
      %s88 = ssub.s32 %s21, %s33
      %s89 = ssub.s32 %s22, %s29
      %s90 = sor.u32 %s88, %s89
      %p91 = scmp.eq.s32.totalorder %s90, 0
      %s93 = sadd.s32 %s92, 1
      %s94 = scalar_select %p91, %s92, %s93
      %p97 = pneg %p91
      %p98 = scmp.eq.s32.totalorder %s14, 1
      %p99 = por %p97, %p98
      %p100 = scmp.ne.s32.totalorder %s92, %s95
      %p101 = scmp.eq.s32.totalorder %s14, 0
      %p102 = por %p100, %p101
      %p103 = scmp.ne.s32.totalorder %s92, %s95
      %p104 = scmp.eq.s32.totalorder %s19, 1
      %p105 = por %p103, %p104
      %p106 = scmp.ne.s32.totalorder %s95, %s96
      %p107 = scmp.eq.s32.totalorder %s19, 0
      %p108 = por %p106, %p107
      %p109 = scmp.ne.s32.totalorder %s95, %s96
      %p110 = scmp.eq.s32.totalorder %s20, 1
      %p111 = por %p109, %p110
      %p113 = scmp.ne.s32.totalorder %s96, %s112
      %p114 = scmp.eq.s32.totalorder %s20, 0
      %p115 = por %p113, %p114
      %p116 = scmp.le.s32.totalorder 1, %s14
      %p117 = scmp.lt.s32.totalorder %s14, 3
      %p118 = pnand %p116, %p117
      %p119 = pneg %p118
      // Predicated region
      $region9: #{tpu_custom_call.1} parent=5 // pred_check
        _
      $region10: #{tpu_custom_call.1} parent=5 // pred_check_branch
        %121 = sbr.rel (%p118) target = $region12
      $region11: #{tpu_custom_call.1} parent=5 // pred_region
        %s122 = ssub.s32 %s14, 1
      $region12: #{tpu_custom_call.1} parent=5 // pred_fallthru
        _
      %p123 = scmp.lt.s32.totalorder %s14, 2
      // Predicated region
      $region13: #{tpu_custom_call.1} parent=5 // pred_check
        %p124 = pneg %p123
      $region14: #{tpu_custom_call.1} parent=5 // pred_check_branch
        %126 = sbr.rel (%p124) target = $region16
      $region15: #{tpu_custom_call.1} parent=5 // pred_region
        // Predicated region
        $region17: #{tpu_custom_call.1} parent=15 // pred_check
          %p127 = pneg %p46
        $region18: #{tpu_custom_call.1} parent=15 // pred_check_branch
          %129 = sbr.rel (%p127) target = $region20
        $region19: #{tpu_custom_call.1} parent=15 // pred_region
          %p130 = scmp.lt.s32.totalorder %s21, 1
          %s131 = scalar_select %p130, %s21, 1
          %s132 = smul.addr %s131, 4
          %s133 = smul.addr %s132, 8
          %s134 = scalar_lea.vmem %s0, %s133
        $region20: #{tpu_custom_call.1} parent=15 // pred_fallthru
          _
        // Predicated region
        $region21: #{tpu_custom_call.1} parent=15 // pred_check
          %p135 = pneg %p74
        $region22: #{tpu_custom_call.1} parent=15 // pred_check_branch
          %137 = sbr.rel (%p135) target = $region24
        $region23: #{tpu_custom_call.1} parent=15 // pred_region
          %s138 = sand.u32 %s64, 1
          %s139 = scalar_lea.sflag [#allocation3], %s138
          %s140 = sand.u32 %s64, 1
          %s141 = smul.addr %s140, 64
          %s142 = scalar_lea.vmem [#allocation2], %s141
          %s143 = smul.u32 2, %s22
          %s145 = ssub.s32 1024, 1024
          %146 = vsyncadd %s139, %s145
          %s147 = smul.addr %s21, 8
          %s148 = sadd.s32 %s143, %s147
          %s149 = smul.addr %s148, 128
          %s150 = scalar_lea.hbm %s1, %s149
          %s151 = sshll.u32 %s142, 4
          %s152 = int_to_ptr.vmem [resolvable:$true] %s151
          %157 = dma.hbm_to_vmem [thread:$0]  %s150, 1024, %s152, %s139, 256, 256, 16
        $region24: #{tpu_custom_call.1} parent=15 // pred_fallthru
          _
      $region16: #{tpu_custom_call.1} parent=5 // pred_fallthru
        _
      %p158 = scmp.le.s32.totalorder 1, %s14
      %p159 = scmp.lt.s32.totalorder %s14, 3
      %p160 = pnand %p158, %p159
      %p161 = pneg %p160
      // Predicated region
      $region25: #{tpu_custom_call.1} parent=5 // pred_check
        _
      $region26: #{tpu_custom_call.1} parent=5 // pred_check_branch
        %163 = sbr.rel (%p160) target = $region28
      $region27: #{tpu_custom_call.1} parent=5 // pred_region
        %s164 = ssub.s32 %s14, 1
        %s165 = sand.u32 %s67, 1
        %s166 = scalar_lea.sflag [#allocation3], %s165
        %s167 = sand.u32 %s67, 1
        %s168 = smul.addr %s167, 64
        %s169 = scalar_lea.vmem [#allocation2], %s168
        // Predicated region
        $region29: #{tpu_custom_call.1} parent=27 // pred_check
          %p170 = pneg %p80
        $region30: #{tpu_custom_call.1} parent=27 // pred_check_branch
          %172 = sbr.rel (%p170) target = $region32
        $region31: #{tpu_custom_call.1} parent=27 // pred_region
          %173 = dma.done %s166, 1024
        $region32: #{tpu_custom_call.1} parent=27 // pred_fallthru
          _
        %p174 = scmp.lt.s32.totalorder %s23, 1
        %s175 = scalar_select %p174, %s23, 1
        %s176 = smul.addr %s175, 4
        %s177 = smul.addr %s176, 8
        %s178 = scalar_lea.vmem %s0, %s177
        %p179 = pneg %p52
        %p180 = pneg %p49
        %s181 = sand.u32 %s67, 1
        %s182 = scalar_lea.sflag [#allocation3], %s181
        %s183 = sand.u32 %s67, 1
        %s184 = smul.addr %s183, 64
        %s185 = scalar_lea.vmem [#allocation2], %s184
        %p186 = pneg %p80
        %p187 = pneg %p77
        %p188 = pneg %p108
        %p189 = pneg %p105
        %s190 = sand.u32 %s95, 1
        %s191 = scalar_lea.sflag [#allocation4], %s190
        %s192 = sand.u32 %s95, 1
        %s193 = smul.addr %s192, 8
        %s194 = scalar_lea.vmem [#allocation5], %s193
        %p195 = scmp.lt.s32.totalorder %s23, 1
        %s196 = scalar_select %p195, %s23, 1
        %s197 = smul.addr %s196, 4
        %s198 = smul.addr %s197, 8
        %s199 = scalar_lea.vmem %s0, %s198
        %s200 = smul.u32 2, %s24
        %s201 = smul.u32 2, %s24
        %v202 = vld [vmem:[%s199] sm:$0xff]
        %v203 = vld [vmem:[%s199 + $0x8] sm:$0xff]
        %v204 = vld [vmem:[%s199 + $0x10] sm:$0xff]
        %v205 = vld [vmem:[%s199 + $0x18] sm:$0xff]
        %v206 = vld [vmem:[%s169] sm:$0xff]
        %v207 = vld [vmem:[%s169 + $0x8] sm:$0xff]
        %v208 = vld [vmem:[%s169 + $0x10] sm:$0xff]
        %v209 = vld [vmem:[%s169 + $0x18] sm:$0xff]
        %v210 = vld [vmem:[%s169 + $0x20] sm:$0xff]
        %v211 = vld [vmem:[%s169 + $0x28] sm:$0xff]
        %v212 = vld [vmem:[%s169 + $0x30] sm:$0xff]
        %v213 = vld [vmem:[%s169 + $0x38] sm:$0xff]
        %215 = vset.pattern.permute.xlu0 0
        %216 = vperm.xlu0 %215, %v202
        %v217 = vpop.permute.xlu0 %216
        %220 = vset.pattern.permute.xlu0 0
        %221 = vperm.xlu0 %220, %v203
        %v222 = vpop.permute.xlu0 %221
        %225 = vset.pattern.permute.xlu0 0
        %226 = vperm.xlu0 %225, %v204
        %v227 = vpop.permute.xlu0 %226
        %230 = vset.pattern.permute.xlu0 0
        %231 = vperm.xlu0 %230, %v205
        %v232 = vpop.permute.xlu0 %231
        %v234 = vmul.f32 %v217, %v206
        %v235 = vmul.f32 %v217, %v207
        %v236 = vmul.f32 %v222, %v208
        %v237 = vmul.f32 %v222, %v209
        %v238 = vmul.f32 %v227, %v210
        %v239 = vmul.f32 %v227, %v211
        %v240 = vmul.f32 %v232, %v212
        %v241 = vmul.f32 %v232, %v213
        %v242 = vrot.slane %v234, 4
        %v243 = vadd.f32 %v234, %v242
        %v244 = vrot.slane %v243, 2
        %v245 = vadd.f32 %v243, %v244
        %v246 = vrot.slane %v245, 1
        %v247 = vadd.f32 %v245, %v246
        %v248 = vrot.slane %v235, 4
        %v249 = vadd.f32 %v235, %v248
        %v250 = vrot.slane %v249, 2
        %v251 = vadd.f32 %v249, %v250
        %v252 = vrot.slane %v251, 1
        %v253 = vadd.f32 %v251, %v252
        %v254 = vrot.slane %v236, 4
        %v255 = vadd.f32 %v236, %v254
        %v256 = vrot.slane %v255, 2
        %v257 = vadd.f32 %v255, %v256
        %v258 = vrot.slane %v257, 1
        %v259 = vadd.f32 %v257, %v258
        %v260 = vrot.slane %v237, 4
        %v261 = vadd.f32 %v237, %v260
        %v262 = vrot.slane %v261, 2
        %v263 = vadd.f32 %v261, %v262
        %v264 = vrot.slane %v263, 1
        %v265 = vadd.f32 %v263, %v264
        %v266 = vrot.slane %v238, 4
        %v267 = vadd.f32 %v238, %v266
        %v268 = vrot.slane %v267, 2
        %v269 = vadd.f32 %v267, %v268
        %v270 = vrot.slane %v269, 1
        %v271 = vadd.f32 %v269, %v270
        %v272 = vrot.slane %v239, 4
        %v273 = vadd.f32 %v239, %v272
        %v274 = vrot.slane %v273, 2
        %v275 = vadd.f32 %v273, %v274
        %v276 = vrot.slane %v275, 1
        %v277 = vadd.f32 %v275, %v276
        %v278 = vrot.slane %v240, 4
        %v279 = vadd.f32 %v240, %v278
        %v280 = vrot.slane %v279, 2
        %v281 = vadd.f32 %v279, %v280
        %v282 = vrot.slane %v281, 1
        %v283 = vadd.f32 %v281, %v282
        %v284 = vrot.slane %v241, 4
        %v285 = vadd.f32 %v241, %v284
        %v286 = vrot.slane %v285, 2
        %v287 = vadd.f32 %v285, %v286
        %v288 = vrot.slane %v287, 1
        %v289 = vadd.f32 %v287, %v288
        %v298 = vcombine.low %v247, %v253
        %v299 = vcombine.low %v259, %v265
        %v300 = vcombine.low %v271, %v277
        %v301 = vcombine.low %v283, %v289
        %v302 = vrot.slane %v299, 7
        %vm303 = vcmask 1041409
        %v304 = vsel %vm303, %v302, %v298
        %vm305 = vcmask 1045509
        %v306 = vsel %vm305, %v302, %v304
        %v307 = vrot.slane %v300, 6
        %vm308 = vcmask 1042434
        %v309 = vsel %vm308, %v307, %v306
        %vm310 = vcmask 1046534
        %v311 = vsel %vm310, %v307, %v309
        %v312 = vrot.slane %v301, 5
        %vm313 = vcmask 1043459
        %v314 = vsel %vm313, %v312, %v311
        %vm315 = vcmask 1047559
        %v316 = vsel %vm315, %v312, %v314
        %318 = vst [vmem:[%s194] sm:$0xff] %v316
        %s319 = sand.u32 %s95, 1
        %s320 = scalar_lea.sflag [#allocation4], %s319
        %s321 = sand.u32 %s95, 1
        %s322 = smul.addr %s321, 8
        %s323 = scalar_lea.vmem [#allocation5], %s322
        // Predicated region
        $region33: #{tpu_custom_call.1} parent=27 // pred_check
          %p324 = pneg %p105
        $region34: #{tpu_custom_call.1} parent=27 // pred_check_branch
          %326 = sbr.rel (%p324) target = $region36
        $region35: #{tpu_custom_call.1} parent=27 // pred_region
          %s327 = smul.u32 2, %s24
          %s329 = ssub.s32 128, 128
          %330 = vsyncadd %s320, %s329
          %s331 = smul.addr %s23, 2
          %s332 = sadd.s32 %s327, %s331
          %s333 = smul.addr %s332, 64
          %s334 = scalar_lea.hbm %s2, %s333
          %s336 = sshll.u32 %s323, 4
          %s337 = int_to_ptr.vmem [resolvable:$true] %s336
          %339 = dma.vmem_to_hbm [thread:$0]  %s337, 128, %s334, %s320
        $region36: #{tpu_custom_call.1} parent=27 // pred_fallthru
          _
      $region28: #{tpu_custom_call.1} parent=5 // pred_fallthru
        _
      %p340 = scmp.le.s32.totalorder 2, %s14
      // Predicated region
      $region37: #{tpu_custom_call.1} parent=5 // pred_check
        %p341 = pneg %p340
      $region38: #{tpu_custom_call.1} parent=5 // pred_check_branch
        %343 = sbr.rel (%p341) target = $region40
      $region39: #{tpu_custom_call.1} parent=5 // pred_region
        %s344 = ssub.s32 %s14, 2
        // Predicated region
        $region41: #{tpu_custom_call.1} parent=39 // pred_check
          %p345 = pneg %p111
        $region42: #{tpu_custom_call.1} parent=39 // pred_check_branch
          %347 = sbr.rel (%p345) target = $region44
        $region43: #{tpu_custom_call.1} parent=39 // pred_region
          %s348 = sand.u32 %s96, 1
          %s349 = scalar_lea.sflag [#allocation4], %s348
          %s350 = sand.u32 %s96, 1
          %s351 = smul.addr %s350, 8
          %s352 = scalar_lea.vmem [#allocation5], %s351
          %353 = dma.done %s349, 128
        $region44: #{tpu_custom_call.1} parent=39 // pred_fallthru
          _
      $region40: #{tpu_custom_call.1} parent=5 // pred_fallthru
        _
    $region6: #{tpu_custom_call.1} parent=1 // loop_footer
      %s18 = sadd.s32 1, %s14
    $region7: #{tpu_custom_call.1} parent=1 // loop_footer_branch
      %13 = sbr.rel target = $region3
    $region8: #{tpu_custom_call.1} parent=1 // loop_exit
      _
    %354 = vsyncpa [#allocation3], 1
    %s355 = scalar_lea.sflag [#allocation3], 1
    %356 = vsyncpa %s355, 1
    %357 = vsyncpa [#allocation4], 1
    %s358 = scalar_lea.sflag [#allocation4], 1
    %359 = vsyncpa %s358, 1

</llo_original>
